<compile_context>
chip_gen: v5e
topology: v5e:2x2
jax: 0.10.0
libtpu: 0.0.40
codegen_flags: <defaults>
</compile_context>

<pallas_src>
import functools

import jax
import jax.numpy as jnp
from jax.experimental import pallas as pl
from jax.experimental.pallas import tpu as pltpu


def _round_up(x, m):
    return ((x + m - 1) // m) * m


def _cdiv(a, b):
    return (a + b - 1) // b


def _pad_dim(d):
    """Lane-dense per-layer padding (128-aligned; 256-aligned when cheap)."""
    p128 = _round_up(d, 128)
    p256 = _round_up(d, 256)
    if d >= 256 and (p256 == p128 or (p256 - d) <= d // 4):
        return p256
    return p128


def _fused_mlp_kernel(*refs, n_layers):
    """All encoder layers fused; intermediates never leave VMEM / vregs.

    refs layout: (x_ref, w0, b0, w1, b1, ..., w_{L-1}, b_{L-1}, o_ref).
    Matmuls run on bf16 operands with an f32 accumulator; bias add / ReLU are
    done in f32, then cast back to bf16 for the next MXU pass.
    """
    x_ref, o_ref = refs[0], refs[-1]
    h = x_ref[...]                               # (TM, pd0), compute dtype
    for li in range(n_layers):                   # static unroll over layers
        w_ref = refs[1 + 2 * li]
        b_ref = refs[2 + 2 * li]
        y = jnp.dot(h, w_ref[...], preferred_element_type=jnp.float32)
        y = y + b_ref[...]                       # (1, pd_out) broadcasts, f32
        if li < n_layers - 1:
            y = jnp.maximum(y, 0.0)              # ReLU on all but last layer
            h = y.astype(w_ref.dtype)            # back to bf16 for next dot
        else:
            h = y
    o_ref[...] = h.astype(o_ref.dtype)


def fused_encoder_forward(x, w_pads, b_pads, pad_dims, out_dim, *,
                          tile_m=256, compute_dtype=jnp.bfloat16):
    """Run the whole per-layer-padded MLP encoder as one Pallas TPU kernel.

    x        : (batch, d_in) f32
    w_pads   : list of (pd_in_i, pd_out_i) compute_dtype padded weights
    b_pads   : list of (1, pd_out_i) f32 padded biases
    pad_dims : per-layer padded widths, len == n_layers + 1
    out_dim  : true output width of the final layer
    """
    batch, d_in = x.shape
    n_layers = len(w_pads)
    pd_in, pd_out = pad_dims[0], pad_dims[-1]

    # Tile-count-aware batch tiling: pad to a multiple of 8 first, choose the
    # tile count (>=2 blocks when there is enough work so v7x's 2 TCs both get
    # work), then size tm. Avoids near-2x over-padding of the batch.
    batch8 = _round_up(batch, 8)
    n_tiles = max(1, _cdiv(batch8, tile_m))
    if batch8 >= 2 * 128:
        n_tiles = max(n_tiles, 2)
    tm = _round_up(_cdiv(batch8, n_tiles), 8)
    batch_pad = tm * n_tiles

    # Lane-dense, zero-padded input slab (only to this layer's padded width).
    x_p = jnp.zeros((batch_pad, pd_in), compute_dtype)
    x_p = x_p.at[:batch, :d_in].set(x.astype(compute_dtype))

    # BlockSpecs: batch tiles walk the grid (double-buffered by default);
    # weights/biases are constant-indexed and single-buffered (VMEM-resident).
    in_specs = [pl.BlockSpec((tm, pd_in), lambda i: (i, 0))]
    operands = [x_p]
    for li in range(n_layers):
        din_p, dout_p = pad_dims[li], pad_dims[li + 1]
        in_specs.append(pl.BlockSpec((din_p, dout_p), lambda i: (0, 0),
                                     pipeline_mode=pl.Buffered(1)))
        in_specs.append(pl.BlockSpec((1, dout_p), lambda i: (0, 0),
                                     pipeline_mode=pl.Buffered(1)))
        operands.append(w_pads[li])
        operands.append(b_pads[li])

    # Cost estimate on the actual padded per-layer shapes.
    flops = sum(2 * batch_pad * pad_dims[i] * pad_dims[i + 1]
                for i in range(n_layers))
    w_bytes = sum(int(w.size) * w.dtype.itemsize for w in w_pads)
    b_bytes = sum(int(b.size) * b.dtype.itemsize for b in b_pads)
    bytes_accessed = (int(x_p.size) * x_p.dtype.itemsize + w_bytes + b_bytes
                      + batch_pad * pd_out * 4)

    # Explicit VMEM budget: resident weights/biases + double-buffered x/out
    # tiles + f32 intermediates, with headroom.
    c_item = jnp.dtype(compute_dtype).itemsize
    x_tile_bytes = tm * pd_in * c_item
    out_tile_bytes = tm * pd_out * 4
    interm_bytes = tm * max(pad_dims) * 4
    vmem_needed = (w_bytes + b_bytes + 2 * x_tile_bytes + 2 * out_tile_bytes
                   + 2 * interm_bytes)
    vmem_limit = min(max(int(1.5 * vmem_needed) + (8 << 20), 32 << 20),
                     128 << 20)

    kernel = functools.partial(_fused_mlp_kernel, n_layers=n_layers)
    out_padded = pl.pallas_call(
        kernel,
        out_shape=jax.ShapeDtypeStruct((batch_pad, pd_out), jnp.float32),
        grid=(batch_pad // tm,),
        in_specs=in_specs,
        out_specs=pl.BlockSpec((tm, pd_out), lambda i: (i, 0)),
        compiler_params=pltpu.CompilerParams(
            dimension_semantics=("parallel",),
            vmem_limit_bytes=vmem_limit,
        ),
        cost_estimate=pl.CostEstimate(
            flops=flops, transcendentals=0, bytes_accessed=bytes_accessed),
    )(*operands)

    # Slice the lane-dense slab back to the true output shape.
    return out_padded[:batch, :out_dim]


class EncoderOnlyVisModelPallas:
    """JAX/Pallas port of EncoderOnlyVisModel (encoder-only MLP).

    Linear -> ReLU for all but the last layer; final layer is Linear only.
    """

    def __init__(self, encoder_dims, key, compute_dtype=jnp.bfloat16):
        assert len(encoder_dims) > 1
        self.encoder_dims = list(encoder_dims)
        self.n_layers = len(encoder_dims) - 1
        self.out_dim = encoder_dims[-1]
        self.compute_dtype = compute_dtype
        # Per-layer padded feature widths (no pad-to-max-dim).
        self.pad_dims = [_pad_dim(d) for d in encoder_dims]

        self.params = []   # unpadded f32 (w, b) for the pure-JAX reference
        self.w_pads = []   # per-layer zero-padded bf16 weights (in, out)
        self.b_pads = []   # per-layer zero-padded f32 biases (1, out)
        for i in range(self.n_layers):
            d_in, d_out = encoder_dims[i], encoder_dims[i + 1]
            pd_in, pd_out = self.pad_dims[i], self.pad_dims[i + 1]
            key, kw, kb = jax.random.split(key, 3)
            # Deterministic init mimicking nn.Linear: U(-1/sqrt(fan_in), +)
            bound = 1.0 / float(d_in) ** 0.5
            w = jax.random.uniform(kw, (d_in, d_out), jnp.float32,
                                   minval=-bound, maxval=bound)
            b = jax.random.uniform(kb, (d_out,), jnp.float32,
                                   minval=-bound, maxval=bound)
            self.params.append((w, b))
            # Zero padding keeps padded lanes exactly zero through the whole
            # network (0 @ W = 0, + 0 bias, ReLU(0) = 0).
            w_p = jnp.zeros((pd_in, pd_out), compute_dtype)
            w_p = w_p.at[:d_in, :d_out].set(w.astype(compute_dtype))
            b_p = jnp.zeros((1, pd_out), jnp.float32).at[0, :d_out].set(b)
            self.w_pads.append(w_p)
            self.b_pads.append(b_p)

    def __call__(self, data):
        # TODO(synk): data.requires_grad_() is autograd bookkeeping only; JAX
        # handles differentiation via transformations, so forward is unchanged.
        return fused_encoder_forward(
            data, self.w_pads, self.b_pads, self.pad_dims, self.out_dim,
            compute_dtype=self.compute_dtype)


def _reference_forward(model, data):
    """Pure-JAX f32 reference for correctness checking."""
    x = data
    n = len(model.params)
    for li, (w, b) in enumerate(model.params):
        x = x @ w + b
        if li < n - 1:
            x = jnp.maximum(x, 0.0)
    return x


if __name__ == "__main__":
    key = jax.random.PRNGKey(0)
    key, kdata, kparams = jax.random.split(key, 3)

    # Small shapes consistent with the module: encoder_dims = [32, 16, 2]
    encoder_dims = [32, 16, 2]
    batch = 8
    data = jax.random.normal(kdata, (batch, encoder_dims[0]), jnp.float32)

    model = EncoderOnlyVisModelPallas(encoder_dims, kparams)

    out = model(data)
    out = jax.block_until_ready(out)

    ref = _reference_forward(model, data)
    assert out.shape == (batch, encoder_dims[-1])
    # bf16 MXU operands with f32 accumulation: ~1e-3..1e-2 relative error.
    assert jnp.allclose(out, ref, atol=2e-2, rtol=2e-2), (
        f"max abs err {jnp.max(jnp.abs(out - ref))}")

    print("KERNEL_OK")
</pallas_src>

<mosaic_0001>
module attributes {stable_mosaic.version = 11 : i64} {
  func.func @_fused_mlp_kernel(%arg0: i32, %arg1: memref<8x128xbf16, #tpu.memory_space<vmem>>, %arg2: memref<128x128xbf16, #tpu.memory_space<vmem>>, %arg3: memref<1x128xf32, #tpu.memory_space<vmem>>, %arg4: memref<128x128xbf16, #tpu.memory_space<vmem>>, %arg5: memref<1x128xf32, #tpu.memory_space<vmem>>, %arg6: memref<8x128xf32, #tpu.memory_space<vmem>>) attributes {dimension_semantics = [#tpu.dimension_semantics<parallel>], iteration_bounds = array<i64: 1>, scalar_prefetch = 0 : i64, scratch_operands = 0 : i64, tpu.core_type = #tpu.core_type<tc>, window_params = [{transform_indices = @transform_0, window_bounds = array<i64: 8, 128>}, {pipeline_mode = #tpu.pipeline_mode<synchronous>, transform_indices = @transform_1, window_bounds = array<i64: 128, 128>}, {pipeline_mode = #tpu.pipeline_mode<synchronous>, transform_indices = @transform_2, window_bounds = array<i64: 1, 128>}, {pipeline_mode = #tpu.pipeline_mode<synchronous>, transform_indices = @transform_3, window_bounds = array<i64: 128, 128>}, {pipeline_mode = #tpu.pipeline_mode<synchronous>, transform_indices = @transform_4, window_bounds = array<i64: 1, 128>}, {transform_indices = @transform_5, window_bounds = array<i64: 8, 128>}]} {
    %c0 = arith.constant 0 : index
    %c0_0 = arith.constant 0 : index
    %0 = vector.load %arg1[%c0, %c0_0] : memref<8x128xbf16, #tpu.memory_space<vmem>>, vector<8x128xbf16>
    %c0_1 = arith.constant 0 : index
    %c0_2 = arith.constant 0 : index
    %1 = vector.load %arg2[%c0_1, %c0_2] : memref<128x128xbf16, #tpu.memory_space<vmem>>, vector<128x128xbf16>
    %cst = arith.constant dense<0.000000e+00> : vector<8x128xf32>
    %2 = tpu.matmul %0, %1, %cst {dimension_numbers = #tpu.dot_dimension_numbers<[1], [0], [0], [1], [0, 0, 1, 1], [], []>} : vector<8x128xbf16>, vector<128x128xbf16>, vector<8x128xf32> -> vector<8x128xf32>
    %c0_3 = arith.constant 0 : index
    %c0_4 = arith.constant 0 : index
    %3 = vector.load %arg3[%c0_3, %c0_4] : memref<1x128xf32, #tpu.memory_space<vmem>>, vector<1x128xf32>
    %4 = vector.broadcast %3 : vector<1x128xf32> to vector<8x128xf32>
    %5 = arith.addf %2, %4 : vector<8x128xf32>
    %cst_5 = arith.constant 0.000000e+00 : f32
    %6 = vector.broadcast %cst_5 : f32 to vector<8x128xf32>
    %7 = arith.maximumf %5, %6 : vector<8x128xf32>
    %8 = arith.truncf %7 : vector<8x128xf32> to vector<8x128xbf16>
    %c0_6 = arith.constant 0 : index
    %c0_7 = arith.constant 0 : index
    %9 = vector.load %arg4[%c0_6, %c0_7] : memref<128x128xbf16, #tpu.memory_space<vmem>>, vector<128x128xbf16>
    %cst_8 = arith.constant dense<0.000000e+00> : vector<8x128xf32>
    %10 = tpu.matmul %8, %9, %cst_8 {dimension_numbers = #tpu.dot_dimension_numbers<[1], [0], [0], [1], [0, 0, 1, 1], [], []>} : vector<8x128xbf16>, vector<128x128xbf16>, vector<8x128xf32> -> vector<8x128xf32>
    %c0_9 = arith.constant 0 : index
    %c0_10 = arith.constant 0 : index
    %11 = vector.load %arg5[%c0_9, %c0_10] : memref<1x128xf32, #tpu.memory_space<vmem>>, vector<1x128xf32>
    %12 = vector.broadcast %11 : vector<1x128xf32> to vector<8x128xf32>
    %13 = arith.addf %10, %12 : vector<8x128xf32>
    %c0_11 = arith.constant 0 : index
    %c0_12 = arith.constant 0 : index
    %14 = vector.load %arg6[%c0_11, %c0_12] : memref<8x128xf32, #tpu.memory_space<vmem>>, vector<8x128xf32>
    tpu.vector_store %arg6[%c0_11, %c0_12], %13 {strides = array<i32>} : memref<8x128xf32, #tpu.memory_space<vmem>>, vector<8x128xf32>,
    return
  }
  func.func @transform_0(%arg0: i32) -> (i32, i32) {
    %c0_i32 = arith.constant 0 : i32
    %c0_i32_0 = arith.constant 0 : i32
    return %arg0, %c0_i32 : i32, i32
  }
  func.func @transform_1(%arg0: i32) -> (i32, i32) {
    %c0_i32 = arith.constant 0 : i32
    %c0_i32_0 = arith.constant 0 : i32
    %c0_i32_1 = arith.constant 0 : i32
    return %c0_i32, %c0_i32_0 : i32, i32
  }
  func.func @transform_2(%arg0: i32) -> (i32, i32) {
    %c0_i32 = arith.constant 0 : i32
    %c0_i32_0 = arith.constant 0 : i32
    %c0_i32_1 = arith.constant 0 : i32
    return %c0_i32, %c0_i32_0 : i32, i32
  }
  func.func @transform_3(%arg0: i32) -> (i32, i32) {
    %c0_i32 = arith.constant 0 : i32
    %c0_i32_0 = arith.constant 0 : i32
    %c0_i32_1 = arith.constant 0 : i32
    return %c0_i32, %c0_i32_0 : i32, i32
  }
  func.func @transform_4(%arg0: i32) -> (i32, i32) {
    %c0_i32 = arith.constant 0 : i32
    %c0_i32_0 = arith.constant 0 : i32
    %c0_i32_1 = arith.constant 0 : i32
    return %c0_i32, %c0_i32_0 : i32, i32
  }
  func.func @transform_5(%arg0: i32) -> (i32, i32) {
    %c0_i32 = arith.constant 0 : i32
    %c0_i32_0 = arith.constant 0 : i32
    return %arg0, %c0_i32 : i32, i32
  }
}

</mosaic_0001>

<llo_original>
// kernel: tpu_custom_call.1
$region0: #{tpu_custom_call.1}
  #allocation0 [shape = 'u32[]', space=smem, size = 0x4, offset = 0x4, fixed_abs, tag = 'smem constant byte address 0x4 - core index']
  #allocation1 [shape = 'u32[72,128]{1,0:T(1,128)}', space=vmem, size = 0x9000, scoped, tag = 'internal scratch']
  %s0 = inlined_call_operand.hbm [shape: bf16[8,128], index: 0, kind: input, shape index: {}]
  %s1 = inlined_call_operand.hbm [shape: bf16[128,128], index: 1, kind: input, shape index: {}]
  %s2 = inlined_call_operand.vmem [shape: f32[1,128], index: 2, kind: input, shape index: {}]
  %s3 = inlined_call_operand.hbm [shape: bf16[128,128], index: 3, kind: input, shape index: {}]
  %s4 = inlined_call_operand.vmem [shape: f32[1,128], index: 4, kind: input, shape index: {}]
  %s5 = inlined_call_operand.hbm [shape: f32[8,128], index: 5, kind: output, shape index: {}]
  %s6 = sld [smem:[#allocation0]]
  $region42: #{tpu_custom_call.1} parent=0
    _
  %s8 = ssub.s32 1, %s6
  %s9 = scalar_select 0, %s8, %s6
  $region1: #{tpu_custom_call.1} parent=0
    #allocation2 [shape = 'u8[2048]{0}', space=vmem, size = 0x800, scoped, tag = 'input window, operand 0, single buffered']
    #allocation3 [shape = 's32[1]{0}', space=sflag, size = 0x4, scoped, tag = 'scoped memory for tpu_custom_call.1']
    #allocation4 [shape = 's32[1]{0}', space=sflag, size = 0x4, scoped, tag = 'scoped memory for tpu_custom_call.1']
    #allocation5 [shape = 'u8[32768]{0}', space=vmem, size = 0x8000, scoped, tag = 'input window, operand 1, single buffered']
    #allocation6 [shape = 's32[1]{0}', space=sflag, size = 0x4, scoped, tag = 'scoped memory for tpu_custom_call.1']
    #allocation7 [shape = 'u8[32768]{0}', space=vmem, size = 0x8000, scoped, tag = 'input window, operand 3, single buffered']
    #allocation8 [shape = 'u8[4096]{0}', space=vmem, size = 0x1000, scoped, tag = 'output window, operand 0, single buffered']
    %10 = vsyncpa [#allocation3], 0
    %11 = vsyncpa [#allocation6], 0
    %12 = vsyncpa [#allocation4], 0
    // Predicated region
    $region2: #{tpu_custom_call.1} parent=1 // pred_check
      _
    $region3: #{tpu_custom_call.1} parent=1 // pred_check_branch
      %14 = sbr.rel (0) target = $region5
    $region4: #{tpu_custom_call.1} parent=1 // pred_region
      %16 = vsyncadd [#allocation3], 0
      %s18 = sshll.u32 %s0, 4
      %s19 = int_to_ptr.hbm [resolvable:$true] %s18
      %s20 = sshll.u32 [#allocation2], 4
      %s21 = int_to_ptr.vmem [resolvable:$true] %s20
      %23 = dma.hbm_to_vmem [thread:$0]  %s19, 64, %s21, [#allocation3]
    $region5: #{tpu_custom_call.1} parent=1 // pred_fallthru
      _
    // Predicated region
    $region6: #{tpu_custom_call.1} parent=1 // pred_check
      _
    $region7: #{tpu_custom_call.1} parent=1 // pred_check_branch
      %25 = sbr.rel (0) target = $region9
    $region8: #{tpu_custom_call.1} parent=1 // pred_region
      %27 = vsyncadd [#allocation6], 0
      %s28 = sshll.u32 %s1, 4
      %s29 = int_to_ptr.hbm [resolvable:$true] %s28
      %s30 = sshll.u32 [#allocation5], 4
      %s31 = int_to_ptr.vmem [resolvable:$true] %s30
      %36 = dma.hbm_to_vmem [thread:$0]  %s29, 1024, %s31, [#allocation6], 64, 64, 4
    $region9: #{tpu_custom_call.1} parent=1 // pred_fallthru
      _
    // Predicated region
    $region10: #{tpu_custom_call.1} parent=1 // pred_check
      _
    $region11: #{tpu_custom_call.1} parent=1 // pred_check_branch
      %38 = sbr.rel (0) target = $region13
    $region12: #{tpu_custom_call.1} parent=1 // pred_region
      _
    $region13: #{tpu_custom_call.1} parent=1 // pred_fallthru
      _
    // Predicated region
    $region14: #{tpu_custom_call.1} parent=1 // pred_check
      _
    $region15: #{tpu_custom_call.1} parent=1 // pred_check_branch
      %40 = sbr.rel (0) target = $region17
    $region16: #{tpu_custom_call.1} parent=1 // pred_region
      %42 = vsyncadd [#allocation6], 0
      %s43 = sshll.u32 %s3, 4
      %s44 = int_to_ptr.hbm [resolvable:$true] %s43
      %s45 = sshll.u32 [#allocation7], 4
      %s46 = int_to_ptr.vmem [resolvable:$true] %s45
      %51 = dma.hbm_to_vmem [thread:$0]  %s44, 1024, %s46, [#allocation6], 64, 64, 4
    $region17: #{tpu_custom_call.1} parent=1 // pred_fallthru
      _
    // Predicated region
    $region18: #{tpu_custom_call.1} parent=1 // pred_check
      _
    $region19: #{tpu_custom_call.1} parent=1 // pred_check_branch
      %53 = sbr.rel (0) target = $region21
    $region20: #{tpu_custom_call.1} parent=1 // pred_region
      _
    $region21: #{tpu_custom_call.1} parent=1 // pred_fallthru
      _
    // Predicated region
    $region22: #{tpu_custom_call.1} parent=1 // pred_check
      _
    $region23: #{tpu_custom_call.1} parent=1 // pred_check_branch
      %55 = sbr.rel (0) target = $region25
    $region24: #{tpu_custom_call.1} parent=1 // pred_region
      %57 = dma.done [#allocation3], 64
    $region25: #{tpu_custom_call.1} parent=1 // pred_fallthru
      _
    // Predicated region
    $region26: #{tpu_custom_call.1} parent=1 // pred_check
      _
    $region27: #{tpu_custom_call.1} parent=1 // pred_check_branch
      %59 = sbr.rel (0) target = $region29
    $region28: #{tpu_custom_call.1} parent=1 // pred_region
      %61 = dma.done [#allocation6], 1024
    $region29: #{tpu_custom_call.1} parent=1 // pred_fallthru
      _
    // Predicated region
    $region30: #{tpu_custom_call.1} parent=1 // pred_check
      _
    $region31: #{tpu_custom_call.1} parent=1 // pred_check_branch
      %63 = sbr.rel (0) target = $region33
    $region32: #{tpu_custom_call.1} parent=1 // pred_region
      %65 = dma.done [#allocation6], 1024
    $region33: #{tpu_custom_call.1} parent=1 // pred_fallthru
      _
    %v66 = vld [vmem:[#allocation2] sm:$0xf]
    %v67 = vld [vmem:[#allocation5] sm:$0xf]
    %v68 = vld [vmem:[#allocation5 + $0x4] sm:$0xf]
    %v69 = vld [vmem:[#allocation5 + $0x8] sm:$0xf]
    %v70 = vld [vmem:[#allocation5 + $0xc] sm:$0xf]
    %v71 = vld [vmem:[#allocation5 + $0x10] sm:$0xf]
    %v72 = vld [vmem:[#allocation5 + $0x14] sm:$0xf]
    %v73 = vld [vmem:[#allocation5 + $0x18] sm:$0xf]
    %v74 = vld [vmem:[#allocation5 + $0x1c] sm:$0xf]
    %v75 = vld [vmem:[#allocation5 + $0x20] sm:$0xf]
    %v76 = vld [vmem:[#allocation5 + $0x24] sm:$0xf]
    %v77 = vld [vmem:[#allocation5 + $0x28] sm:$0xf]
    %v78 = vld [vmem:[#allocation5 + $0x2c] sm:$0xf]
    %v79 = vld [vmem:[#allocation5 + $0x30] sm:$0xf]
    %v80 = vld [vmem:[#allocation5 + $0x34] sm:$0xf]
    %v81 = vld [vmem:[#allocation5 + $0x38] sm:$0xf]
    %v82 = vld [vmem:[#allocation5 + $0x3c] sm:$0xf]
    %v83 = vld [vmem:[%s2] sm:$0x1]
    %v85 = vperm.slane %v83, 0
    %v103 = vunpack.c.l.b16 %v67
    %v104 = vunpack.c.l.b16 %v68
    %v105 = vunpack.c.l.b16 %v69
    %v106 = vunpack.c.l.b16 %v70
    %v107 = vunpack.c.l.b16 %v71
    %v108 = vunpack.c.l.b16 %v72
    %v109 = vunpack.c.l.b16 %v73
    %v110 = vunpack.c.l.b16 %v74
    %v111 = vunpack.c.l.b16 %v75
    %v112 = vunpack.c.l.b16 %v76
    %v113 = vunpack.c.l.b16 %v77
    %v114 = vunpack.c.l.b16 %v78
    %v115 = vunpack.c.l.b16 %v79
    %v116 = vunpack.c.l.b16 %v80
    %v117 = vunpack.c.l.b16 %v81
    %v118 = vunpack.c.l.b16 %v82
    %v119 = vpack.c.b16 %v104, %v103
    %v120 = vpack.c.b16 %v106, %v105
    %v121 = vpack.c.b16 %v108, %v107
    %v122 = vpack.c.b16 %v110, %v109
    %v123 = vpack.c.b16 %v112, %v111
    %v124 = vpack.c.b16 %v114, %v113
    %v125 = vpack.c.b16 %v116, %v115
    %v126 = vpack.c.b16 %v118, %v117
    %135 = vmatpush.bf16.msra.mxu0 %v126
    %136 = vmatpush.bf16.msra.mxu0 %v125
    %137 = vmatpush.bf16.msra.mxu0 %v124
    %138 = vmatpush.bf16.msra.mxu0 %v123
    %139 = vmatpush.bf16.msra.mxu0 %v122
    %140 = vmatpush.bf16.msra.mxu0 %v121
    %141 = vmatpush.bf16.msra.mxu0 %v120
    %142 = vmatpush.bf16.msra.mxu0 %v119
    %143 = vmatmul.bf16.gmra.mxu0 %v66
    %v144 = vpop.f32.mrf.mxu0
    %v145 = vadd.f32 %v85, %v144
    %v146 = vpop.f32.mrf.mxu0
    %147 = vdwg.mxu0
    %v148 = vmax.f32 %v145, 0.0
    %v149 = vpack.c.bf16 %v148, %v148
    %v150 = vld [vmem:[#allocation7] sm:$0xf]
    %v151 = vld [vmem:[#allocation7 + $0x4] sm:$0xf]
    %v152 = vld [vmem:[#allocation7 + $0x8] sm:$0xf]
    %v153 = vld [vmem:[#allocation7 + $0xc] sm:$0xf]
    %v154 = vld [vmem:[#allocation7 + $0x10] sm:$0xf]
    %v155 = vld [vmem:[#allocation7 + $0x14] sm:$0xf]
    %v156 = vld [vmem:[#allocation7 + $0x18] sm:$0xf]
    %v157 = vld [vmem:[#allocation7 + $0x1c] sm:$0xf]
    %v158 = vld [vmem:[#allocation7 + $0x20] sm:$0xf]
    %v159 = vld [vmem:[#allocation7 + $0x24] sm:$0xf]
    %v160 = vld [vmem:[#allocation7 + $0x28] sm:$0xf]
    %v161 = vld [vmem:[#allocation7 + $0x2c] sm:$0xf]
    %v162 = vld [vmem:[#allocation7 + $0x30] sm:$0xf]
    %v163 = vld [vmem:[#allocation7 + $0x34] sm:$0xf]
    %v164 = vld [vmem:[#allocation7 + $0x38] sm:$0xf]
    %v165 = vld [vmem:[#allocation7 + $0x3c] sm:$0xf]
    %v166 = vld [vmem:[%s4] sm:$0x1]
    %v168 = vperm.slane %v166, 0
    %v186 = vunpack.c.l.b16 %v150
    %v187 = vunpack.c.l.b16 %v151
    %v188 = vunpack.c.l.b16 %v152
    %v189 = vunpack.c.l.b16 %v153
    %v190 = vunpack.c.l.b16 %v154
    %v191 = vunpack.c.l.b16 %v155
    %v192 = vunpack.c.l.b16 %v156
    %v193 = vunpack.c.l.b16 %v157
    %v194 = vunpack.c.l.b16 %v158
    %v195 = vunpack.c.l.b16 %v159
    %v196 = vunpack.c.l.b16 %v160
    %v197 = vunpack.c.l.b16 %v161
    %v198 = vunpack.c.l.b16 %v162
    %v199 = vunpack.c.l.b16 %v163
    %v200 = vunpack.c.l.b16 %v164
    %v201 = vunpack.c.l.b16 %v165
    %v202 = vpack.c.b16 %v187, %v186
    %v203 = vpack.c.b16 %v189, %v188
    %v204 = vpack.c.b16 %v191, %v190
    %v205 = vpack.c.b16 %v193, %v192
    %v206 = vpack.c.b16 %v195, %v194
    %v207 = vpack.c.b16 %v197, %v196
    %v208 = vpack.c.b16 %v199, %v198
    %v209 = vpack.c.b16 %v201, %v200
    %218 = vmatpush.bf16.msra.mxu0 %v209
    %219 = vmatpush.bf16.msra.mxu0 %v208
    %220 = vmatpush.bf16.msra.mxu0 %v207
    %221 = vmatpush.bf16.msra.mxu0 %v206
    %222 = vmatpush.bf16.msra.mxu0 %v205
    %223 = vmatpush.bf16.msra.mxu0 %v204
    %224 = vmatpush.bf16.msra.mxu0 %v203
    %225 = vmatpush.bf16.msra.mxu0 %v202
    %226 = vmatmul.bf16.gmra.mxu0 %v149
    %v227 = vpop.f32.mrf.mxu0
    %v228 = vadd.f32 %v168, %v227
    %v229 = vpop.f32.mrf.mxu0
    %230 = vdwg.mxu0
    %231 = vst [vmem:[#allocation8] sm:$0xff] %v228
    // Predicated region
    $region34: #{tpu_custom_call.1} parent=1 // pred_check
      _
    $region35: #{tpu_custom_call.1} parent=1 // pred_check_branch
      %233 = sbr.rel (0) target = $region37
    $region36: #{tpu_custom_call.1} parent=1 // pred_region
      %235 = vsyncadd [#allocation4], 0
      %s237 = sshll.u32 [#allocation8], 4
      %s238 = int_to_ptr.vmem [resolvable:$true] %s237
      %s239 = sshll.u32 %s5, 4
      %s240 = int_to_ptr.hbm [resolvable:$true] %s239
      %242 = dma.vmem_to_hbm [thread:$0]  %s238, 128, %s240, [#allocation4]
    $region37: #{tpu_custom_call.1} parent=1 // pred_fallthru
      _
    // Predicated region
    $region38: #{tpu_custom_call.1} parent=1 // pred_check
      _
    $region39: #{tpu_custom_call.1} parent=1 // pred_check_branch
      %244 = sbr.rel (0) target = $region41
    $region40: #{tpu_custom_call.1} parent=1 // pred_region
      %246 = dma.done [#allocation4], 128
    $region41: #{tpu_custom_call.1} parent=1 // pred_fallthru
      _
    %247 = vsyncpa [#allocation3], 1
    %248 = vsyncpa [#allocation6], 1
    %249 = vsyncpa [#allocation4], 1

</llo_original>
